<compile_context>
chip_gen: v7x
topology: tpu7x:2x2x1
jax: 0.10.0
libtpu: 0.0.40
codegen_flags: <defaults>
</compile_context>

<pallas_src>
import jax
import jax.numpy as jnp
from jax import lax
from jax.experimental import pallas as pl
from jax.experimental.pallas import tpu as pltpu

EPS = 1e-5  # nn.BatchNorm2d default eps


def _round_up(x, m):
    return (x + m - 1) // m * m


# ---------------------------------------------------------------------------
# Kernel 1: tiled conv-as-matmul (bf16 operands, f32 accumulate) + BN partial stats
# ---------------------------------------------------------------------------
def conv_stats_kernel(p_ref, w_ref, z_ref, s_ref, ss_ref):
    # p_ref: (TM, Kp) bf16 patches, w_ref: (Kp, OCp) bf16 weights (VMEM-resident block)
    z = jnp.dot(p_ref[...], w_ref[...], preferred_element_type=jnp.float32)  # (TM, OCp) f32
    z_ref[...] = z
    # Per-tile partial BatchNorm statistics; summed across tiles in the wrapper so the
    # M-tiled grid stays "parallel" while the global batch stats remain exact.
    s_ref[0] = jnp.sum(z, axis=0, keepdims=True)
    ss_ref[0] = jnp.sum(z * z, axis=0, keepdims=True)


# ---------------------------------------------------------------------------
# Kernel 2: BN normalize + ReLU + fused MaxPool2d(3, 2, 1)
# ---------------------------------------------------------------------------
def _make_bn_relu_pool_kernel(OH, OW, PW, OCp):
    oh_odd = (OH % 2) == 1
    ow_odd = (OW % 2) == 1

    def kernel(scale_ref, shift_ref, zc_ref, zp_ref, o_ref, shp_ref):
        ph = pl.program_id(1)
        sc = scale_ref[...]                     # (1, OCp)
        sh = shift_ref[...]                     # (1, OCp)

        def norm_relu(v):                       # v: (PW, OCp) raw conv values
            return jnp.maximum(v * sc + sh, 0.0)

        r_a = zc_ref[0, 0]                      # conv row 2*ph        (PW, 2*OCp)
        r_b = zc_ref[0, 1]                      # conv row 2*ph + 1
        r_c = zp_ref[0, 1]                      # conv row 2*ph - 1 (odd row of prev block)

        # even (col 2*pw) / odd (col 2*pw+1) W halves are aligned 128-lane slices
        a_e, a_o = norm_relu(r_a[:, :OCp]), norm_relu(r_a[:, OCp:])
        b_e, b_o = norm_relu(r_b[:, :OCp]), norm_relu(r_b[:, OCp:])
        c_e, c_o = norm_relu(r_c[:, :OCp]), norm_relu(r_c[:, OCp:])

        # Mask H taps outside the conv output.  Post-ReLU values are >= 0, so 0 is an
        # exact stand-in for "-inf padding / excluded".
        if oh_odd:
            bm = jnp.where(2 * ph + 1 < OH, 1.0, 0.0)
            b_e, b_o = b_e * bm, b_o * bm
        cm = jnp.where(ph > 0, 1.0, 0.0)
        c_e, c_o = c_e * cm, c_o * cm

        he = jnp.maximum(jnp.maximum(a_e, b_e), c_e)   # H-max at columns 2*pw
        ho = jnp.maximum(jnp.maximum(a_o, b_o), c_o)   # H-max at columns 2*pw + 1
        if ow_odd:
            pw_ids = lax.broadcasted_iota(jnp.int32, (PW, OCp), 0)
            ho = jnp.where(2 * pw_ids + 1 < OW, ho, 0.0)

        # ho_shift[pw] = ho[pw - 1]  (column 2*pw - 1), zero at pw == 0; built via a small
        # VMEM scratch so only contiguous (unstrided) slices are used.
        shp_ref[...] = jnp.zeros_like(shp_ref)
        shp_ref[1:PW + 1, :] = ho
        ho_shift = shp_ref[0:PW, :]

        o_ref[0, 0] = jnp.maximum(jnp.maximum(he, ho), ho_shift)

    return kernel


# ---------------------------------------------------------------------------
# Wrapper
# ---------------------------------------------------------------------------
def swiftlane_base_resblock(x, w, b, gamma, beta):
    del b  # Conv bias before train-mode BatchNorm is cancelled exactly by the mean subtraction.

    N, C, H, W = x.shape
    OC, _, KH, KW = w.shape
    SH = SW = 2
    PAD = 3
    OH = (H + 2 * PAD - KH) // SH + 1
    OW = (W + 2 * PAD - KW) // SW + 1
    PH = (OH + 2 - 3) // 2 + 1
    PW = (OW + 2 - 3) // 2 + 1

    M = N * OH * OW
    K = C * KH * KW
    Kp = _round_up(K, 128)      # lane-clean contraction dim
    OCp = _round_up(OC, 128)    # lane-dense outputs (no masked partial stores)

    # ---- im2col glue: bf16, K contiguous in the last (lane) dim ----
    xh = jnp.pad(x.transpose(0, 2, 3, 1).astype(jnp.bfloat16),
                 ((0, 0), (PAD, PAD), (PAD, PAD), (0, 0)))
    taps = [xh[:, kh:kh + SH * OH:SH, kw:kw + SW * OW:SW, :]
            for kh in range(KH) for kw in range(KW)]
    patches = jnp.stack(taps, axis=3).reshape(M, K)         # (M, K), K order = (kh, kw, c)
    # TODO(synk): im2col is still materialized by XLA (~12x input blow-up); a fully in-kernel
    # 7x7 conv (49 accumulated matmuls over the padded NHWC input) would remove that traffic.

    w2 = w.transpose(2, 3, 1, 0).reshape(K, OC).astype(jnp.bfloat16)

    # Zero-pad K / OC / M (exact for the matmul and for the BN sums).
    Mp = _round_up(M, 16)
    TM = next(t for t in (512, 256, 128, 64, 32, 16) if Mp % t == 0)  # fits v7x 64MiB VMEM budget
    Mt = Mp // TM
    patches = jnp.pad(patches, ((0, Mp - M), (0, Kp - K)))
    w2 = jnp.pad(w2, ((0, Kp - K), (0, OCp - OC)))

    cost = pl.CostEstimate(
        flops=2 * Mp * Kp * OCp,
        transcendentals=0,
        bytes_accessed=Mp * Kp * 2 + Kp * OCp * 2 + Mp * OCp * 4 + 2 * Mt * OCp * 4)

    z_flat, s_part, ss_part = pl.pallas_call(
        conv_stats_kernel,
        grid=(Mt,),
        in_specs=[pl.BlockSpec((TM, Kp), lambda i: (i, 0)),
                  pl.BlockSpec((Kp, OCp), lambda i: (0, 0))],     # weights stay VMEM-resident
        out_specs=(pl.BlockSpec((TM, OCp), lambda i: (i, 0)),
                   pl.BlockSpec((1, 1, OCp), lambda i: (i, 0, 0)),
                   pl.BlockSpec((1, 1, OCp), lambda i: (i, 0, 0))),
        out_shape=(jax.ShapeDtypeStruct((Mp, OCp), jnp.float32),
                   jax.ShapeDtypeStruct((Mt, 1, OCp), jnp.float32),
                   jax.ShapeDtypeStruct((Mt, 1, OCp), jnp.float32)),
        compiler_params=pltpu.CompilerParams(dimension_semantics=("parallel",)),
        cost_estimate=cost,
    )(patches, w2)

    # ---- finalize global batch statistics (tiny), fold gamma/beta into scale/shift ----
    cnt = jnp.float32(M)
    mean = jnp.sum(s_part, axis=0)[0] / cnt                              # (OCp,)
    var = jnp.maximum(jnp.sum(ss_part, axis=0)[0] / cnt - mean * mean, 0.0)
    inv = lax.rsqrt(var + EPS)
    gamma_p = jnp.pad(gamma.astype(jnp.float32), (0, OCp - OC))
    beta_p = jnp.pad(beta.astype(jnp.float32), (0, OCp - OC))
    scale = (gamma_p * inv).reshape(1, OCp)
    shift = (beta_p - mean * gamma_p * inv).reshape(1, OCp)

    # ---- view conv output as (N, 2*PH, PW, 2*OCp): free reshapes (pad only if OH/OW odd) ----
    z4 = z_flat[:M].reshape(N, OH, OW, OCp)
    OHe, OWe = 2 * PH, 2 * PW
    if OHe != OH or OWe != OW:
        z4 = jnp.pad(z4, ((0, 0), (0, OHe - OH), (0, OWe - OW), (0, 0)))
    z5 = z4.reshape(N, OHe, PW, 2 * OCp)

    # TODO(synk): for large spatial sizes, cover several pooled rows per grid step to amortize
    # the ~0.35us/step pipeline overhead (currently one pooled row per step).
    pool_kernel = _make_bn_relu_pool_kernel(OH, OW, PW, OCp)
    pooled = pl.pallas_call(
        pool_kernel,
        grid=(N, PH),
        in_specs=[pl.BlockSpec((1, OCp), lambda n, ph: (0, 0)),
                  pl.BlockSpec((1, OCp), lambda n, ph: (0, 0)),
                  pl.BlockSpec((1, 2, PW, 2 * OCp), lambda n, ph: (n, ph, 0, 0)),
                  pl.BlockSpec((1, 2, PW, 2 * OCp),
                               lambda n, ph: (n, jnp.maximum(ph - 1, 0), 0, 0))],
        out_specs=pl.BlockSpec((1, 1, PW, OCp), lambda n, ph: (n, ph, 0, 0)),
        out_shape=jax.ShapeDtypeStruct((N, PH, PW, OCp), jnp.float32),
        scratch_shapes=[pltpu.VMEM((PW + 1, OCp), jnp.float32)],
        compiler_params=pltpu.CompilerParams(
            dimension_semantics=("parallel", "parallel")),
    )(scale, shift, z5, z5)

    # back to NCHW, drop channel padding
    return pooled[:, :, :, :OC].transpose(0, 3, 1, 2)


# ---------------------------------------------------------------------------
# Pure-JAX reference (verification only).  Conv operands are cast to bf16 exactly like the
# kernel (f32 accumulation), so the comparison isolates structural errors; the reference keeps
# the conv bias, which validates that dropping it before train-mode BN is a no-op.
# ---------------------------------------------------------------------------
def reference(x, w, b, gamma, beta):
    z = lax.conv_general_dilated(
        x.astype(jnp.bfloat16), w.astype(jnp.bfloat16), (2, 2), ((3, 3), (3, 3)),
        dimension_numbers=("NCHW", "OIHW", "NCHW"),
        preferred_element_type=jnp.float32)
    z = z + b[None, :, None, None]
    mean = jnp.mean(z, axis=(0, 2, 3), keepdims=True)
    var = jnp.mean(jnp.square(z - mean), axis=(0, 2, 3), keepdims=True)
    y = (z - mean) * lax.rsqrt(var + EPS)
    y = y * gamma[None, :, None, None] + beta[None, :, None, None]
    y = jnp.maximum(y, 0.0)
    return lax.reduce_window(
        y, -jnp.inf, lax.max,
        window_dimensions=(1, 1, 3, 3),
        window_strides=(1, 1, 2, 2),
        padding=((0, 0), (0, 0), (1, 1), (1, 1)))


if __name__ == "__main__":
    key = jax.random.PRNGKey(0)
    k1, k2, k3, k4, k5 = jax.random.split(key, 5)

    N, C, H, W = 2, 4, 16, 16
    OC = 64

    x = jax.random.normal(k1, (N, C, H, W), jnp.float32)
    w = 0.05 * jax.random.normal(k2, (OC, C, 7, 7), jnp.float32)
    b = 0.1 * jax.random.normal(k3, (OC,), jnp.float32)
    gamma = 1.0 + 0.1 * jax.random.normal(k4, (OC,), jnp.float32)
    beta = 0.1 * jax.random.normal(k5, (OC,), jnp.float32)

    fwd = jax.jit(swiftlane_base_resblock)
    out = jax.block_until_ready(fwd(x, w, b, gamma, beta))

    ref = jax.block_until_ready(reference(x, w, b, gamma, beta))
    assert out.shape == ref.shape == (N, OC, 4, 4), out.shape
    max_err = float(jnp.max(jnp.abs(out - ref)))
    assert max_err < 2e-3, f"mismatch vs reference: {max_err}"

    print("KERNEL_OK")
</pallas_src>

<mosaic_0001>
module attributes {stable_mosaic.version = 11 : i64} {
  func.func @conv_stats_kernel(%arg0: i32, %arg1: memref<128x256xbf16, #tpu.memory_space<vmem>>, %arg2: memref<256x128xbf16, #tpu.memory_space<vmem>>, %arg3: memref<128x128xf32, #tpu.memory_space<vmem>>, %arg4: memref<1x1x128xf32, #tpu.memory_space<vmem>>, %arg5: memref<1x1x128xf32, #tpu.memory_space<vmem>>) attributes {dimension_semantics = [#tpu.dimension_semantics<parallel>], iteration_bounds = array<i64: 1>, scalar_prefetch = 0 : i64, scratch_operands = 0 : i64, tpu.core_type = #tpu.core_type<tc>, window_params = [{transform_indices = @transform_0, window_bounds = array<i64: 128, 256>}, {pipeline_mode = #tpu.pipeline_mode<synchronous>, transform_indices = @transform_1, window_bounds = array<i64: 256, 128>}, {transform_indices = @transform_2, window_bounds = array<i64: 128, 128>}, {transform_indices = @transform_3, window_bounds = array<i64: 1, 1, 128>}, {transform_indices = @transform_4, window_bounds = array<i64: 1, 1, 128>}]} {
    %c0 = arith.constant 0 : index
    %c0_0 = arith.constant 0 : index
    %0 = vector.load %arg1[%c0, %c0_0] : memref<128x256xbf16, #tpu.memory_space<vmem>>, vector<128x256xbf16>
    %c0_1 = arith.constant 0 : index
    %c0_2 = arith.constant 0 : index
    %1 = vector.load %arg2[%c0_1, %c0_2] : memref<256x128xbf16, #tpu.memory_space<vmem>>, vector<256x128xbf16>
    %cst = arith.constant dense<0.000000e+00> : vector<128x128xf32>
    %2 = tpu.matmul %0, %1, %cst {dimension_numbers = #tpu.dot_dimension_numbers<[1], [0], [0], [1], [0, 0, 1, 1], [], []>} : vector<128x256xbf16>, vector<256x128xbf16>, vector<128x128xf32> -> vector<128x128xf32>
    %c0_3 = arith.constant 0 : index
    %c0_4 = arith.constant 0 : index
    %3 = vector.load %arg3[%c0_3, %c0_4] : memref<128x128xf32, #tpu.memory_space<vmem>>, vector<128x128xf32>
    tpu.vector_store %arg3[%c0_3, %c0_4], %2 {strides = array<i32>} : memref<128x128xf32, #tpu.memory_space<vmem>>, vector<128x128xf32>,
    %cst_5 = arith.constant dense<0.000000e+00> : vector<128xf32>
    %4 = vector.multi_reduction <add>, %2, %cst_5 [0] : vector<128x128xf32> to vector<128xf32>
    %5 = vector.shape_cast %4 : vector<128xf32> to vector<1x128xf32>
    %c0_6 = arith.constant 0 : index
    %c0_7 = arith.constant 0 : index
    %c0_8 = arith.constant 0 : index
    %6 = vector.load %arg4[%c0_6, %c0_7, %c0_8] : memref<1x1x128xf32, #tpu.memory_space<vmem>>, vector<1x1x128xf32>
    %7 = vector.shape_cast %6 : vector<1x1x128xf32> to vector<1x128xf32>
    %8 = vector.shape_cast %5 : vector<1x128xf32> to vector<1x1x128xf32>
    tpu.vector_store %arg4[%c0_6, %c0_7, %c0_8], %8 {strides = array<i32>} : memref<1x1x128xf32, #tpu.memory_space<vmem>>, vector<1x1x128xf32>,
    %9 = arith.mulf %2, %2 : vector<128x128xf32>
    %cst_9 = arith.constant dense<0.000000e+00> : vector<128xf32>
    %10 = vector.multi_reduction <add>, %9, %cst_9 [0] : vector<128x128xf32> to vector<128xf32>
    %11 = vector.shape_cast %10 : vector<128xf32> to vector<1x128xf32>
    %c0_10 = arith.constant 0 : index
    %c0_11 = arith.constant 0 : index
    %c0_12 = arith.constant 0 : index
    %12 = vector.load %arg5[%c0_10, %c0_11, %c0_12] : memref<1x1x128xf32, #tpu.memory_space<vmem>>, vector<1x1x128xf32>
    %13 = vector.shape_cast %12 : vector<1x1x128xf32> to vector<1x128xf32>
    %14 = vector.shape_cast %11 : vector<1x128xf32> to vector<1x1x128xf32>
    tpu.vector_store %arg5[%c0_10, %c0_11, %c0_12], %14 {strides = array<i32>} : memref<1x1x128xf32, #tpu.memory_space<vmem>>, vector<1x1x128xf32>,
    return
  }
  func.func @transform_0(%arg0: i32) -> (i32, i32) {
    %c0_i32 = arith.constant 0 : i32
    %c0_i32_0 = arith.constant 0 : i32
    return %arg0, %c0_i32 : i32, i32
  }
  func.func @transform_1(%arg0: i32) -> (i32, i32) {
    %c0_i32 = arith.constant 0 : i32
    %c0_i32_0 = arith.constant 0 : i32
    %c0_i32_1 = arith.constant 0 : i32
    return %c0_i32, %c0_i32_0 : i32, i32
  }
  func.func @transform_2(%arg0: i32) -> (i32, i32) {
    %c0_i32 = arith.constant 0 : i32
    %c0_i32_0 = arith.constant 0 : i32
    return %arg0, %c0_i32 : i32, i32
  }
  func.func @transform_3(%arg0: i32) -> (i32, i32, i32) {
    %c0_i32 = arith.constant 0 : i32
    %c0_i32_0 = arith.constant 0 : i32
    %c0_i32_1 = arith.constant 0 : i32
    return %arg0, %c0_i32, %c0_i32_0 : i32, i32, i32
  }
  func.func @transform_4(%arg0: i32) -> (i32, i32, i32) {
    %c0_i32 = arith.constant 0 : i32
    %c0_i32_0 = arith.constant 0 : i32
    %c0_i32_1 = arith.constant 0 : i32
    return %arg0, %c0_i32, %c0_i32_0 : i32, i32, i32
  }
}

module attributes {stable_mosaic.version = 11 : i64} {
  func.func @kernel(%arg0: i32, %arg1: i32, %arg2: memref<1x128xf32, #tpu.memory_space<vmem>>, %arg3: memref<1x128xf32, #tpu.memory_space<vmem>>, %arg4: memref<1x2x4x256xf32, #tpu.memory_space<vmem>>, %arg5: memref<1x2x4x256xf32, #tpu.memory_space<vmem>>, %arg6: memref<1x1x4x128xf32, #tpu.memory_space<vmem>>, %arg7: memref<5x128xf32, #tpu.memory_space<vmem>>) attributes {dimension_semantics = [#tpu.dimension_semantics<parallel>, #tpu.dimension_semantics<parallel>], iteration_bounds = array<i64: 2, 4>, scalar_prefetch = 0 : i64, scratch_operands = 1 : i64, tpu.core_type = #tpu.core_type<tc>, window_params = [{pipeline_mode = #tpu.pipeline_mode<synchronous>, transform_indices = @transform_0, window_bounds = array<i64: 1, 128>}, {pipeline_mode = #tpu.pipeline_mode<synchronous>, transform_indices = @transform_1, window_bounds = array<i64: 1, 128>}, {transform_indices = @transform_2, window_bounds = array<i64: 1, 2, 4, 256>}, {transform_indices = @transform_3, window_bounds = array<i64: 1, 2, 4, 256>}, {transform_indices = @transform_4, window_bounds = array<i64: 1, 1, 4, 128>}]} {
    %c0 = arith.constant 0 : index
    %c0_0 = arith.constant 0 : index
    %0 = vector.load %arg2[%c0, %c0_0] : memref<1x128xf32, #tpu.memory_space<vmem>>, vector<1x128xf32>
    %c0_1 = arith.constant 0 : index
    %c0_2 = arith.constant 0 : index
    %1 = vector.load %arg3[%c0_1, %c0_2] : memref<1x128xf32, #tpu.memory_space<vmem>>, vector<1x128xf32>
    %c0_3 = arith.constant 0 : index
    %c0_4 = arith.constant 0 : index
    %c0_5 = arith.constant 0 : index
    %c0_6 = arith.constant 0 : index
    %2 = vector.load %arg4[%c0_3, %c0_4, %c0_5, %c0_6] : memref<1x2x4x256xf32, #tpu.memory_space<vmem>>, vector<1x1x4x256xf32>
    %3 = vector.shape_cast %2 : vector<1x1x4x256xf32> to vector<4x256xf32>
    %c0_7 = arith.constant 0 : index
    %c1 = arith.constant 1 : index
    %c0_8 = arith.constant 0 : index
    %c0_9 = arith.constant 0 : index
    %4 = vector.load %arg4[%c0_7, %c1, %c0_8, %c0_9] : memref<1x2x4x256xf32, #tpu.memory_space<vmem>>, vector<1x1x4x256xf32>
    %5 = vector.shape_cast %4 : vector<1x1x4x256xf32> to vector<4x256xf32>
    %c0_10 = arith.constant 0 : index
    %c1_11 = arith.constant 1 : index
    %c0_12 = arith.constant 0 : index
    %c0_13 = arith.constant 0 : index
    %6 = vector.load %arg5[%c0_10, %c1_11, %c0_12, %c0_13] : memref<1x2x4x256xf32, #tpu.memory_space<vmem>>, vector<1x1x4x256xf32>
    %7 = vector.shape_cast %6 : vector<1x1x4x256xf32> to vector<4x256xf32>
    %8 = vector.extract_strided_slice %3 {offsets = [0, 0], sizes = [4, 128], strides = [1, 1]} : vector<4x256xf32> to vector<4x128xf32>
    %9 = vector.broadcast %0 : vector<1x128xf32> to vector<4x128xf32>
    %10 = arith.mulf %8, %9 : vector<4x128xf32>
    %11 = vector.broadcast %1 : vector<1x128xf32> to vector<4x128xf32>
    %12 = arith.addf %10, %11 : vector<4x128xf32>
    %cst = arith.constant 0.000000e+00 : f32
    %13 = vector.broadcast %cst : f32 to vector<4x128xf32>
    %14 = arith.maximumf %12, %13 : vector<4x128xf32>
    %15 = vector.extract_strided_slice %3 {offsets = [0, 128], sizes = [4, 128], strides = [1, 1]} : vector<4x256xf32> to vector<4x128xf32>
    %16 = vector.broadcast %0 : vector<1x128xf32> to vector<4x128xf32>
    %17 = arith.mulf %15, %16 : vector<4x128xf32>
    %18 = vector.broadcast %1 : vector<1x128xf32> to vector<4x128xf32>
    %19 = arith.addf %17, %18 : vector<4x128xf32>
    %cst_14 = arith.constant 0.000000e+00 : f32
    %20 = vector.broadcast %cst_14 : f32 to vector<4x128xf32>
    %21 = arith.maximumf %19, %20 : vector<4x128xf32>
    %22 = vector.extract_strided_slice %5 {offsets = [0, 0], sizes = [4, 128], strides = [1, 1]} : vector<4x256xf32> to vector<4x128xf32>
    %23 = vector.broadcast %0 : vector<1x128xf32> to vector<4x128xf32>
    %24 = arith.mulf %22, %23 : vector<4x128xf32>
    %25 = vector.broadcast %1 : vector<1x128xf32> to vector<4x128xf32>
    %26 = arith.addf %24, %25 : vector<4x128xf32>
    %cst_15 = arith.constant 0.000000e+00 : f32
    %27 = vector.broadcast %cst_15 : f32 to vector<4x128xf32>
    %28 = arith.maximumf %26, %27 : vector<4x128xf32>
    %29 = vector.extract_strided_slice %5 {offsets = [0, 128], sizes = [4, 128], strides = [1, 1]} : vector<4x256xf32> to vector<4x128xf32>
    %30 = vector.broadcast %0 : vector<1x128xf32> to vector<4x128xf32>
    %31 = arith.mulf %29, %30 : vector<4x128xf32>
    %32 = vector.broadcast %1 : vector<1x128xf32> to vector<4x128xf32>
    %33 = arith.addf %31, %32 : vector<4x128xf32>
    %cst_16 = arith.constant 0.000000e+00 : f32
    %34 = vector.broadcast %cst_16 : f32 to vector<4x128xf32>
    %35 = arith.maximumf %33, %34 : vector<4x128xf32>
    %36 = vector.extract_strided_slice %7 {offsets = [0, 0], sizes = [4, 128], strides = [1, 1]} : vector<4x256xf32> to vector<4x128xf32>
    %37 = vector.broadcast %0 : vector<1x128xf32> to vector<4x128xf32>
    %38 = arith.mulf %36, %37 : vector<4x128xf32>
    %39 = vector.broadcast %1 : vector<1x128xf32> to vector<4x128xf32>
    %40 = arith.addf %38, %39 : vector<4x128xf32>
    %cst_17 = arith.constant 0.000000e+00 : f32
    %41 = vector.broadcast %cst_17 : f32 to vector<4x128xf32>
    %42 = arith.maximumf %40, %41 : vector<4x128xf32>
    %43 = vector.extract_strided_slice %7 {offsets = [0, 128], sizes = [4, 128], strides = [1, 1]} : vector<4x256xf32> to vector<4x128xf32>
    %44 = vector.broadcast %0 : vector<1x128xf32> to vector<4x128xf32>
    %45 = arith.mulf %43, %44 : vector<4x128xf32>
    %46 = vector.broadcast %1 : vector<1x128xf32> to vector<4x128xf32>
    %47 = arith.addf %45, %46 : vector<4x128xf32>
    %cst_18 = arith.constant 0.000000e+00 : f32
    %48 = vector.broadcast %cst_18 : f32 to vector<4x128xf32>
    %49 = arith.maximumf %47, %48 : vector<4x128xf32>
    %c0_i32 = arith.constant 0 : i32
    %50 = arith.cmpi sgt, %arg1, %c0_i32 : i32
    %cst_19 = arith.constant 1.000000e+00 : f32
    %cst_20 = arith.constant 0.000000e+00 : f32
    %51 = arith.select %50, %cst_19, %cst_20 : f32
    %52 = vector.broadcast %51 : f32 to vector<4x128xf32>
    %53 = arith.mulf %42, %52 : vector<4x128xf32>
    %54 = vector.broadcast %51 : f32 to vector<4x128xf32>
    %55 = arith.mulf %49, %54 : vector<4x128xf32>
    %56 = arith.maximumf %14, %28 : vector<4x128xf32>
    %57 = arith.maximumf %56, %53 : vector<4x128xf32>
    %58 = arith.maximumf %21, %35 : vector<4x128xf32>
    %59 = arith.maximumf %58, %55 : vector<4x128xf32>
    %cst_21 = arith.constant 0.000000e+00 : f32
    %60 = vector.broadcast %cst_21 : f32 to vector<5x128xf32>
    %c0_22 = arith.constant 0 : index
    %c0_23 = arith.constant 0 : index
    %61 = vector.load %arg7[%c0_22, %c0_23] : memref<5x128xf32, #tpu.memory_space<vmem>>, vector<5x128xf32>
    tpu.vector_store %arg7[%c0_22, %c0_23], %60 {strides = array<i32>} : memref<5x128xf32, #tpu.memory_space<vmem>>, vector<5x128xf32>,
    %c1_24 = arith.constant 1 : index
    %c0_25 = arith.constant 0 : index
    %62 = vector.load %arg7[%c1_24, %c0_25] : memref<5x128xf32, #tpu.memory_space<vmem>>, vector<4x128xf32>
    tpu.vector_store %arg7[%c1_24, %c0_25], %59 {strides = array<i32>} : memref<5x128xf32, #tpu.memory_space<vmem>>, vector<4x128xf32>,
    %c0_26 = arith.constant 0 : index
    %c0_27 = arith.constant 0 : index
    %63 = vector.load %arg7[%c0_26, %c0_27] : memref<5x128xf32, #tpu.memory_space<vmem>>, vector<4x128xf32>
    %64 = arith.maximumf %57, %59 : vector<4x128xf32>
    %65 = arith.maximumf %64, %63 : vector<4x128xf32>
    %c0_28 = arith.constant 0 : index
    %c0_29 = arith.constant 0 : index
    %c0_30 = arith.constant 0 : index
    %c0_31 = arith.constant 0 : index
    %66 = vector.load %arg6[%c0_28, %c0_29, %c0_30, %c0_31] : memref<1x1x4x128xf32, #tpu.memory_space<vmem>>, vector<1x1x4x128xf32>
    %67 = vector.shape_cast %66 : vector<1x1x4x128xf32> to vector<4x128xf32>
    %68 = vector.shape_cast %65 : vector<4x128xf32> to vector<1x1x4x128xf32>
    tpu.vector_store %arg6[%c0_28, %c0_29, %c0_30, %c0_31], %68 {strides = array<i32>} : memref<1x1x4x128xf32, #tpu.memory_space<vmem>>, vector<1x1x4x128xf32>,
    return
  }
  func.func @transform_0(%arg0: i32, %arg1: i32) -> (i32, i32) {
    %c0_i32 = arith.constant 0 : i32
    %c0_i32_0 = arith.constant 0 : i32
    %c0_i32_1 = arith.constant 0 : i32
    return %c0_i32, %c0_i32_0 : i32, i32
  }
  func.func @transform_1(%arg0: i32, %arg1: i32) -> (i32, i32) {
    %c0_i32 = arith.constant 0 : i32
    %c0_i32_0 = arith.constant 0 : i32
    %c0_i32_1 = arith.constant 0 : i32
    return %c0_i32, %c0_i32_0 : i32, i32
  }
  func.func @transform_2(%arg0: i32, %arg1: i32) -> (i32, i32, i32, i32) {
    %c0_i32 = arith.constant 0 : i32
    %c0_i32_0 = arith.constant 0 : i32
    %c0_i32_1 = arith.constant 0 : i32
    return %arg0, %arg1, %c0_i32, %c0_i32_0 : i32, i32, i32, i32
  }
  func.func @transform_3(%arg0: i32, %arg1: i32) -> (i32, i32, i32, i32) {
    %c1_i32 = arith.constant 1 : i32
    %0 = arith.subi %arg1, %c1_i32 : i32
    %c0_i32 = arith.constant 0 : i32
    %1 = arith.maxsi %0, %c0_i32 : i32
    %c0_i32_0 = arith.constant 0 : i32
    %c0_i32_1 = arith.constant 0 : i32
    %c0_i32_2 = arith.constant 0 : i32
    return %arg0, %1, %c0_i32_0, %c0_i32_1 : i32, i32, i32, i32
  }
  func.func @transform_4(%arg0: i32, %arg1: i32) -> (i32, i32, i32, i32) {
    %c0_i32 = arith.constant 0 : i32
    %c0_i32_0 = arith.constant 0 : i32
    %c0_i32_1 = arith.constant 0 : i32
    return %arg0, %arg1, %c0_i32, %c0_i32_0 : i32, i32, i32, i32
  }
}

</mosaic_0001>

<llo_original>
// kernel: swiftlane_base_resblock.3
$region0: #{swiftlane_base_resblock.3}
  #allocation0 [shape = 'u32[]', space=smem, size = 0x4, offset = 0x4, fixed_abs, tag = 'smem constant byte address 0x4 - core index']
  #allocation1 [shape = 'u32[144,128]{1,0:T(1,128)}', space=vmem, size = 0x12000, scoped, tag = 'internal scratch']
  #allocation2 [shape = 'f32[5,128]{1,0:T(8,128)}', space=vmem, size = 0x1000, scoped, tag = 'scratch operand']
  %s0 = inlined_call_operand.vmem [shape: f32[1,128], index: 0, kind: input, shape index: {}]
  %s1 = inlined_call_operand.vmem [shape: f32[1,128], index: 1, kind: input, shape index: {}]
  %s2 = inlined_call_operand.vmem [shape: f32[2,8,4,256], index: 2, kind: input, shape index: {}, may-alias: {2,3}]
  %s3 = inlined_call_operand.vmem [shape: f32[2,8,4,256], index: 3, kind: input, shape index: {}, may-alias: {2,3}]
  %s4 = inlined_call_operand.vmem [shape: f32[2,4,4,128], index: 4, kind: output, shape index: {}]
  %s5 = sld [smem:[#allocation0]]
  $region49: #{swiftlane_base_resblock.3} parent=0
    _
  %s7 = ssub.s32 1, %s5
  %s8 = scalar_select 0, %s7, %s5
  loop: start=0, step=1, limit=10
  $region2: #{swiftlane_base_resblock.3} parent=0 // loop_pre_header
    _
  $region3: #{swiftlane_base_resblock.3} parent=0 // loop_header
    %s10 = sphi 0, %s14
    %p11 = scmp.ge.s32.totalorder %s10, 10
    %s17 = sphi 0, %s29
    %s18 = sphi 0, %s25
    %s19 = sphi 0, %s17
    %s20 = sphi 0, %s18
    %s21 = sphi 0, %s19
    %s22 = sphi 0, %s20
    %s30 = sphi 0, %s30
    %s32 = sphi 0, %s30
    %s33 = sphi 0, %s32
    %s47 = sphi 0, %s33
    %s51 = sphi 0, %s51
    %s53 = sphi 0, %s51
    %s54 = sphi 0, %s53
    %s68 = sphi 0, %s54
    %s76 = sphi 0, %s78
    %s79 = sphi 0, %s76
    %s80 = sphi 0, %s79
    %s96 = sphi 0, %s80
    %s110 = sphi 0, %s112
    %s113 = sphi 0, %s110
    %s114 = sphi 0, %s113
    %s130 = sphi 0, %s114
    %s138 = sphi 0, %s140
    %s141 = sphi 0, %s138
    %s142 = sphi 0, %s141
    %s158 = sphi 0, %s142
  $region4: #{swiftlane_base_resblock.3} parent=0 // loop_header_branch
    %13 = sbr.rel (%p11) target = $region8
  $region5: #{swiftlane_base_resblock.3} parent=0 // loop_body
    %s15 = ssub.s32 %s10, 1
    %s16 = ssub.s32 %s10, 2
    %s23 = sadd.s32 1, %s18
    %p24 = scmp.ge.s32.totalorder %s23, 4
    %s25 = scalar_select %p24, 0, %s23
    %s26 = sadd.s32 1, %s17
    %s27 = scalar_select %p24, %s26, %s17
    %p28 = scmp.ge.s32.totalorder %s27, 2
    %s29 = scalar_select %p28, 0, %s27
    %s31 = sadd.s32 %s30, 1
    %p34 = scmp.eq.s32.totalorder %s10, 7
    %p35 = scmp.ne.s32.totalorder %s30, %s32
    %p36 = scmp.eq.s32.totalorder %s10, 0
    %p37 = por %p35, %p36
    %p38 = scmp.ne.s32.totalorder %s30, %s32
    %p39 = scmp.eq.s32.totalorder %s15, 7
    %p40 = por %p38, %p39
    %p41 = scmp.ne.s32.totalorder %s32, %s33
    %p42 = scmp.eq.s32.totalorder %s15, 0
    %p43 = por %p41, %p42
    %p44 = scmp.ne.s32.totalorder %s32, %s33
    %p45 = scmp.eq.s32.totalorder %s16, 7
    %p46 = por %p44, %p45
    %p48 = scmp.ne.s32.totalorder %s33, %s47
    %p49 = scmp.eq.s32.totalorder %s16, 0
    %p50 = por %p48, %p49
    %s52 = sadd.s32 %s51, 1
    %p55 = scmp.eq.s32.totalorder %s10, 7
    %p56 = scmp.ne.s32.totalorder %s51, %s53
    %p57 = scmp.eq.s32.totalorder %s10, 0
    %p58 = por %p56, %p57
    %p59 = scmp.ne.s32.totalorder %s51, %s53
    %p60 = scmp.eq.s32.totalorder %s15, 7
    %p61 = por %p59, %p60
    %p62 = scmp.ne.s32.totalorder %s53, %s54
    %p63 = scmp.eq.s32.totalorder %s15, 0
    %p64 = por %p62, %p63
    %p65 = scmp.ne.s32.totalorder %s53, %s54
    %p66 = scmp.eq.s32.totalorder %s16, 7
    %p67 = por %p65, %p66
    %p69 = scmp.ne.s32.totalorder %s54, %s68
    %p70 = scmp.eq.s32.totalorder %s16, 0
    %p71 = por %p69, %p70
    %s72 = ssub.s32 %s17, %s29
    %s73 = ssub.s32 %s18, %s25
    %s74 = sor.u32 %s72, %s73
    %p75 = scmp.eq.s32.totalorder %s74, 0
    %s77 = sadd.s32 %s76, 1
    %s78 = scalar_select %p75, %s76, %s77
    %p81 = pneg %p75
    %p82 = scmp.eq.s32.totalorder %s10, 7
    %p83 = por %p81, %p82
    %p84 = scmp.ne.s32.totalorder %s76, %s79
    %p85 = scmp.eq.s32.totalorder %s10, 0
    %p86 = por %p84, %p85
    %p87 = scmp.ne.s32.totalorder %s76, %s79
    %p88 = scmp.eq.s32.totalorder %s15, 7
    %p89 = por %p87, %p88
    %p90 = scmp.ne.s32.totalorder %s79, %s80
    %p91 = scmp.eq.s32.totalorder %s15, 0
    %p92 = por %p90, %p91
    %p93 = scmp.ne.s32.totalorder %s79, %s80
    %p94 = scmp.eq.s32.totalorder %s16, 7
    %p95 = por %p93, %p94
    %p97 = scmp.ne.s32.totalorder %s80, %s96
    %p98 = scmp.eq.s32.totalorder %s16, 0
    %p99 = por %p97, %p98
    %s100 = ssub.s32 %s18, 1
    %p101 = scmp.gt.s32.totalorder %s100, 0
    %s102 = scalar_select %p101, %s100, 0
    %s103 = ssub.s32 %s25, 1
    %p104 = scmp.gt.s32.totalorder %s103, 0
    %s105 = scalar_select %p104, %s103, 0
    %s106 = ssub.s32 %s17, %s29
    %s107 = ssub.s32 %s102, %s105
    %s108 = sor.u32 %s106, %s107
    %p109 = scmp.eq.s32.totalorder %s108, 0
    %s111 = sadd.s32 %s110, 1
    %s112 = scalar_select %p109, %s110, %s111
    %p115 = pneg %p109
    %p116 = scmp.eq.s32.totalorder %s10, 7
    %p117 = por %p115, %p116
    %p118 = scmp.ne.s32.totalorder %s110, %s113
    %p119 = scmp.eq.s32.totalorder %s10, 0
    %p120 = por %p118, %p119
    %p121 = scmp.ne.s32.totalorder %s110, %s113
    %p122 = scmp.eq.s32.totalorder %s15, 7
    %p123 = por %p121, %p122
    %p124 = scmp.ne.s32.totalorder %s113, %s114
    %p125 = scmp.eq.s32.totalorder %s15, 0
    %p126 = por %p124, %p125
    %p127 = scmp.ne.s32.totalorder %s113, %s114
    %p128 = scmp.eq.s32.totalorder %s16, 7
    %p129 = por %p127, %p128
    %p131 = scmp.ne.s32.totalorder %s114, %s130
    %p132 = scmp.eq.s32.totalorder %s16, 0
    %p133 = por %p131, %p132
    %s134 = ssub.s32 %s17, %s29
    %s135 = ssub.s32 %s18, %s25
    %s136 = sor.u32 %s134, %s135
    %p137 = scmp.eq.s32.totalorder %s136, 0
    %s139 = sadd.s32 %s138, 1
    %s140 = scalar_select %p137, %s138, %s139
    %p143 = pneg %p137
    %p144 = scmp.eq.s32.totalorder %s10, 7
    %p145 = por %p143, %p144
    %p146 = scmp.ne.s32.totalorder %s138, %s141
    %p147 = scmp.eq.s32.totalorder %s10, 0
    %p148 = por %p146, %p147
    %p149 = scmp.ne.s32.totalorder %s138, %s141
    %p150 = scmp.eq.s32.totalorder %s15, 7
    %p151 = por %p149, %p150
    %p152 = scmp.ne.s32.totalorder %s141, %s142
    %p153 = scmp.eq.s32.totalorder %s15, 0
    %p154 = por %p152, %p153
    %p155 = scmp.ne.s32.totalorder %s141, %s142
    %p156 = scmp.eq.s32.totalorder %s16, 7
    %p157 = por %p155, %p156
    %p159 = scmp.ne.s32.totalorder %s142, %s158
    %p160 = scmp.eq.s32.totalorder %s16, 0
    %p161 = por %p159, %p160
    %p162 = scmp.le.s32.totalorder 1, %s10
    %p163 = scmp.lt.s32.totalorder %s10, 9
    %p164 = pnand %p162, %p163
    %p165 = pneg %p164
    // Predicated region
    $region9: #{swiftlane_base_resblock.3} parent=5 // pred_check
      _
    $region10: #{swiftlane_base_resblock.3} parent=5 // pred_check_branch
      %167 = sbr.rel (%p164) target = $region12
    $region11: #{swiftlane_base_resblock.3} parent=5 // pred_region
      %s168 = ssub.s32 %s10, 1
      // Predicated region
      $region13: #{swiftlane_base_resblock.3} parent=11 // pred_check
        %p169 = pneg %p43
      $region14: #{swiftlane_base_resblock.3} parent=11 // pred_check_branch
        %171 = sbr.rel (%p169) target = $region16
      $region15: #{swiftlane_base_resblock.3} parent=11 // pred_region
        _
      $region16: #{swiftlane_base_resblock.3} parent=11 // pred_fallthru
        _
      // Predicated region
      $region17: #{swiftlane_base_resblock.3} parent=11 // pred_check
        %p172 = pneg %p64
      $region18: #{swiftlane_base_resblock.3} parent=11 // pred_check_branch
        %174 = sbr.rel (%p172) target = $region20
      $region19: #{swiftlane_base_resblock.3} parent=11 // pred_region
        _
      $region20: #{swiftlane_base_resblock.3} parent=11 // pred_fallthru
        _
    $region12: #{swiftlane_base_resblock.3} parent=5 // pred_fallthru
      _
    %p175 = scmp.lt.s32.totalorder %s10, 8
    // Predicated region
    $region21: #{swiftlane_base_resblock.3} parent=5 // pred_check
      %p176 = pneg %p175
    $region22: #{swiftlane_base_resblock.3} parent=5 // pred_check_branch
      %178 = sbr.rel (%p176) target = $region24
    $region23: #{swiftlane_base_resblock.3} parent=5 // pred_region
      // Predicated region
      $region25: #{swiftlane_base_resblock.3} parent=23 // pred_check
        %p179 = pneg %p86
      $region26: #{swiftlane_base_resblock.3} parent=23 // pred_check_branch
        %181 = sbr.rel (%p179) target = $region28
      $region27: #{swiftlane_base_resblock.3} parent=23 // pred_region
        %s182 = smul.u32 2, %s18
        %p183 = scmp.lt.s32.totalorder %s17, 1
        %s184 = scalar_select %p183, %s17, 1
        %p185 = scmp.lt.s32.totalorder %s182, 7
        %s186 = scalar_select %p185, %s182, 7
        %s187 = smul.addr %s186, 2
        %s188 = smul.addr %s184, 16
        %s189 = sadd.s32 %s187, %s188
        %s190 = smul.addr %s189, 4
        %s191 = scalar_lea.vmem %s2, %s190
        %s192 = smul.u32 2, %s18
      $region28: #{swiftlane_base_resblock.3} parent=23 // pred_fallthru
        _
      // Predicated region
      $region29: #{swiftlane_base_resblock.3} parent=23 // pred_check
        %p193 = pneg %p120
      $region30: #{swiftlane_base_resblock.3} parent=23 // pred_check_branch
        %195 = sbr.rel (%p193) target = $region32
      $region31: #{swiftlane_base_resblock.3} parent=23 // pred_region
        %s196 = ssub.s32 %s18, 1
        %p197 = scmp.gt.s32.totalorder %s196, 0
        %s198 = scalar_select %p197, %s196, 0
        %s199 = smul.u32 2, %s198
        %p200 = scmp.lt.s32.totalorder %s17, 1
        %s201 = scalar_select %p200, %s17, 1
        %p202 = scmp.lt.s32.totalorder %s199, 7
        %s203 = scalar_select %p202, %s199, 7
        %s204 = smul.addr %s203, 2
        %s205 = smul.addr %s201, 16
        %s206 = sadd.s32 %s204, %s205
        %s207 = smul.addr %s206, 4
        %s208 = scalar_lea.vmem %s3, %s207
        %s209 = ssub.s32 %s18, 1
        %p210 = scmp.gt.s32.totalorder %s209, 0
        %s211 = scalar_select %p210, %s209, 0
        %s212 = smul.u32 2, %s211
      $region32: #{swiftlane_base_resblock.3} parent=23 // pred_fallthru
        _
    $region24: #{swiftlane_base_resblock.3} parent=5 // pred_fallthru
      _
    %p213 = scmp.le.s32.totalorder 1, %s10
    %p214 = scmp.lt.s32.totalorder %s10, 9
    %p215 = pnand %p213, %p214
    %p216 = pneg %p215
    // Predicated region
    $region33: #{swiftlane_base_resblock.3} parent=5 // pred_check
      _
    $region34: #{swiftlane_base_resblock.3} parent=5 // pred_check_branch
      %218 = sbr.rel (%p215) target = $region36
    $region35: #{swiftlane_base_resblock.3} parent=5 // pred_region
      %s219 = ssub.s32 %s10, 1
      %p220 = pneg %p43
      %p221 = pneg %p40
      %p222 = pneg %p64
      %p223 = pneg %p61
      %s224 = smul.u32 2, %s20
      %p225 = scmp.lt.s32.totalorder %s19, 1
      %s226 = scalar_select %p225, %s19, 1
      %p227 = scmp.lt.s32.totalorder %s224, 7
      %s228 = scalar_select %p227, %s224, 7
      %s229 = smul.addr %s228, 2
      %s230 = smul.addr %s226, 16
      %s231 = sadd.s32 %s229, %s230
      %s232 = smul.addr %s231, 4
      %s233 = scalar_lea.vmem %s2, %s232
      %p234 = pneg %p92
      %p235 = pneg %p89
      %s236 = ssub.s32 %s20, 1
      %p237 = scmp.gt.s32.totalorder %s236, 0
      %s238 = scalar_select %p237, %s236, 0
      %s239 = smul.u32 2, %s238
      %p240 = scmp.lt.s32.totalorder %s19, 1
      %s241 = scalar_select %p240, %s19, 1
      %p242 = scmp.lt.s32.totalorder %s239, 7
      %s243 = scalar_select %p242, %s239, 7
      %s244 = smul.addr %s243, 2
      %s245 = smul.addr %s241, 16
      %s246 = sadd.s32 %s244, %s245
      %s247 = smul.addr %s246, 4
      %s248 = scalar_lea.vmem %s3, %s247
      %p249 = pneg %p126
      %p250 = pneg %p123
      %p251 = pneg %p154
      %p252 = pneg %p151
      %p253 = scmp.lt.s32.totalorder %s19, 1
      %s254 = scalar_select %p253, %s19, 1
      %p255 = scmp.lt.s32.totalorder %s20, 3
      %s256 = scalar_select %p255, %s20, 3
      %s257 = smul.addr %s254, 4
      %s258 = sadd.s32 %s256, %s257
      %s259 = smul.addr %s258, 4
      %s260 = scalar_lea.vmem %s4, %s259
      %s261 = smul.u32 2, %s20
      %p262 = scmp.lt.s32.totalorder %s19, 1
      %s263 = scalar_select %p262, %s19, 1
      %p264 = scmp.lt.s32.totalorder %s261, 7
      %s265 = scalar_select %p264, %s261, 7
      %s266 = smul.addr %s265, 2
      %s267 = smul.addr %s263, 16
      %s268 = sadd.s32 %s266, %s267
      %s269 = smul.addr %s268, 4
      %s270 = scalar_lea.vmem %s2, %s269
      %s271 = smul.u32 2, %s20
      %s272 = ssub.s32 %s20, 1
      %p273 = scmp.gt.s32.totalorder %s272, 0
      %s274 = scalar_select %p273, %s272, 0
      %s275 = smul.u32 2, %s274
      %p276 = scmp.lt.s32.totalorder %s19, 1
      %s277 = scalar_select %p276, %s19, 1
      %p278 = scmp.lt.s32.totalorder %s275, 7
      %s279 = scalar_select %p278, %s275, 7
      %s280 = smul.addr %s279, 2
      %s281 = smul.addr %s277, 16
      %s282 = sadd.s32 %s280, %s281
      %s283 = smul.addr %s282, 4
      %s284 = scalar_lea.vmem %s3, %s283
      %s285 = ssub.s32 %s20, 1
      %p286 = scmp.gt.s32.totalorder %s285, 0
      %s287 = scalar_select %p286, %s285, 0
      %s288 = smul.u32 2, %s287
      %p289 = scmp.lt.s32.totalorder %s19, 1
      %s290 = scalar_select %p289, %s19, 1
      %p291 = scmp.lt.s32.totalorder %s20, 3
      %s292 = scalar_select %p291, %s20, 3
      %s293 = smul.addr %s290, 4
      %s294 = sadd.s32 %s292, %s293
      %s295 = smul.addr %s294, 4
      %s296 = scalar_lea.vmem %s4, %s295
      %v297 = vld [vmem:[%s0] sm:$0x1]
      %v298 = vld [vmem:[%s1] sm:$0x1]
      %v299 = vld [vmem:[%s270] sm:$0xff]
      %s300 = scalar_lea.vmem %s270, 8
      %v301 = vld [vmem:[%s300] sm:$0xff]
      %s302 = scalar_lea.vmem %s284, 8
      %v303 = vld [vmem:[%s302] sm:$0xff]
      %v305 = vlaneseq
      %v306 = vshrl.u32 %v305, 7
      %v307 = vsub.s32 0, %v306
      %v308 = vrot.slane %v297, %v307
      %v310 = vmul.f32 %v299, %v308
      %v312 = vlaneseq
      %v313 = vshrl.u32 %v312, 7
      %v314 = vsub.s32 0, %v313
      %v315 = vrot.slane %v298, %v314
      %v317 = vadd.f32 %v310, %v315
      %v318 = vmax.f32 %v317, 0.0
      %v320 = vrot.slane %v299, 4
      %v322 = vmul.f32 %v320, %v308
      %v323 = vadd.f32 %v322, %v315
      %v324 = vmax.f32 %v323, 0.0
      %v325 = vmul.f32 %v301, %v308
      %v326 = vadd.f32 %v325, %v315
      %v327 = vmax.f32 %v326, 0.0
      %v329 = vrot.slane %v301, 4
      %v331 = vmul.f32 %v329, %v308
      %v332 = vadd.f32 %v331, %v315
      %v333 = vmax.f32 %v332, 0.0
      %v334 = vmul.f32 %v303, %v308
      %v335 = vadd.f32 %v334, %v315
      %v336 = vmax.f32 %v335, 0.0
      %v338 = vrot.slane %v303, 4
      %v340 = vmul.f32 %v338, %v308
      %v341 = vadd.f32 %v340, %v315
      %v342 = vmax.f32 %v341, 0.0
      %p343 = scmp.gt.s32.totalorder %s20, 0
      %s344 = scalar_select %p343, 1.0, 0.0
      %v345 = vstv %s344
      %v346 = vmul.f32 %v336, %v345
      %v347 = vmul.f32 %v342, %v345
      %v348 = vmax.f32 %v318, %v327
      %v349 = vmax.f32 %v348, %v346
      %v350 = vmax.f32 %v324, %v333
      %v351 = vmax.f32 %v350, %v347
      %352 = vst [vmem:[#allocation2] sm:$0x1f] 0.0
      %353 = vst [vmem:[#allocation2 + $0x1] sm:$0xf] %v351
      %v354 = vld [vmem:[#allocation2] sm:$0xf]
      %v355 = vmax.f32 %v349, %v351
      %v356 = vmax.f32 %v355, %v354
      %357 = vst [vmem:[%s296] sm:$0xf] %v356
      %p358 = scmp.lt.s32.totalorder %s19, 1
      %s359 = scalar_select %p358, %s19, 1
      %p360 = scmp.lt.s32.totalorder %s20, 3
      %s361 = scalar_select %p360, %s20, 3
      %s362 = smul.addr %s359, 4
      %s363 = sadd.s32 %s361, %s362
      %s364 = smul.addr %s363, 4
      %s365 = scalar_lea.vmem %s4, %s364
      // Predicated region
      $region37: #{swiftlane_base_resblock.3} parent=35 // pred_check
        %p366 = pneg %p151
      $region38: #{swiftlane_base_resblock.3} parent=35 // pred_check_branch
        %368 = sbr.rel (%p366) target = $region40
      $region39: #{swiftlane_base_resblock.3} parent=35 // pred_region
        _
      $region40: #{swiftlane_base_resblock.3} parent=35 // pred_fallthru
        _
    $region36: #{swiftlane_base_resblock.3} parent=5 // pred_fallthru
      _
    %p369 = scmp.le.s32.totalorder 2, %s10
    // Predicated region
    $region41: #{swiftlane_base_resblock.3} parent=5 // pred_check
      %p370 = pneg %p369
    $region42: #{swiftlane_base_resblock.3} parent=5 // pred_check_branch
      %372 = sbr.rel (%p370) target = $region44
    $region43: #{swiftlane_base_resblock.3} parent=5 // pred_region
      %s373 = ssub.s32 %s10, 2
      // Predicated region
      $region45: #{swiftlane_base_resblock.3} parent=43 // pred_check
        %p374 = pneg %p157
      $region46: #{swiftlane_base_resblock.3} parent=43 // pred_check_branch
        %376 = sbr.rel (%p374) target = $region48
      $region47: #{swiftlane_base_resblock.3} parent=43 // pred_region
        %p377 = scmp.lt.s32.totalorder %s21, 1
        %s378 = scalar_select %p377, %s21, 1
        %p379 = scmp.lt.s32.totalorder %s22, 3
        %s380 = scalar_select %p379, %s22, 3
        %s381 = smul.addr %s378, 4
        %s382 = sadd.s32 %s380, %s381
        %s383 = smul.addr %s382, 4
        %s384 = scalar_lea.vmem %s4, %s383
      $region48: #{swiftlane_base_resblock.3} parent=43 // pred_fallthru
        _
    $region44: #{swiftlane_base_resblock.3} parent=5 // pred_fallthru
      _
  $region6: #{swiftlane_base_resblock.3} parent=0 // loop_footer
    %s14 = sadd.s32 1, %s10
  $region7: #{swiftlane_base_resblock.3} parent=0 // loop_footer_branch
    %9 = sbr.rel target = $region3
  $region8: #{swiftlane_base_resblock.3} parent=0 // loop_exit
    _

// kernel: swiftlane_base_resblock.2
$region0: #{swiftlane_base_resblock.2}
  #allocation0 [shape = 'u32[]', space=smem, size = 0x4, offset = 0x4, fixed_abs, tag = 'smem constant byte address 0x4 - core index']
  #allocation1 [shape = 'u32[144,128]{1,0:T(1,128)}', space=vmem, size = 0x12000, scoped, tag = 'internal scratch']
  %s0 = inlined_call_operand.vmem [shape: bf16[128,256], index: 0, kind: input, shape index: {}]
  %s1 = inlined_call_operand.vmem [shape: bf16[256,128], index: 1, kind: input, shape index: {}]
  %s2 = inlined_call_operand.vmem [shape: f32[128,128], index: 2, kind: output, shape index: {0}]
  %s3 = inlined_call_operand.vmem [shape: f32[1,1,128], index: 3, kind: output, shape index: {1}]
  %s4 = inlined_call_operand.vmem [shape: f32[1,1,128], index: 4, kind: output, shape index: {2}]
  %5 = xla_tuple %s2, %s3, %s4
  %s6 = sld [smem:[#allocation0]]
  $region34: #{swiftlane_base_resblock.2} parent=0
    _
  %s8 = ssub.s32 1, %s6
  %s9 = scalar_select 0, %s8, %s6
  // Predicated region
  $region2: #{swiftlane_base_resblock.2} parent=0 // pred_check
    _
  $region3: #{swiftlane_base_resblock.2} parent=0 // pred_check_branch
    %11 = sbr.rel (0) target = $region5
  $region4: #{swiftlane_base_resblock.2} parent=0 // pred_region
    _
  $region5: #{swiftlane_base_resblock.2} parent=0 // pred_fallthru
    _
  // Predicated region
  $region6: #{swiftlane_base_resblock.2} parent=0 // pred_check
    _
  $region7: #{swiftlane_base_resblock.2} parent=0 // pred_check_branch
    %13 = sbr.rel (0) target = $region9
  $region8: #{swiftlane_base_resblock.2} parent=0 // pred_region
    _
  $region9: #{swiftlane_base_resblock.2} parent=0 // pred_fallthru
    _
  %v15 = vld [vmem:[%s0] sm:$0xff]
  %v16 = vld [vmem:[%s0 + $0x8] sm:$0xff]
  %v17 = vld [vmem:[%s0 + $0x10] sm:$0xff]
  %v18 = vld [vmem:[%s0 + $0x18] sm:$0xff]
  %v19 = vld [vmem:[%s0 + $0x20] sm:$0xff]
  %v20 = vld [vmem:[%s0 + $0x28] sm:$0xff]
  %v21 = vld [vmem:[%s0 + $0x30] sm:$0xff]
  %v22 = vld [vmem:[%s0 + $0x38] sm:$0xff]
  %v23 = vld [vmem:[%s0 + $0x40] sm:$0xff]
  %v24 = vld [vmem:[%s0 + $0x48] sm:$0xff]
  %v25 = vld [vmem:[%s0 + $0x50] sm:$0xff]
  %v26 = vld [vmem:[%s0 + $0x58] sm:$0xff]
  %v27 = vld [vmem:[%s0 + $0x60] sm:$0xff]
  %v28 = vld [vmem:[%s0 + $0x68] sm:$0xff]
  %v29 = vld [vmem:[%s0 + $0x70] sm:$0xff]
  %v30 = vld [vmem:[%s0 + $0x78] sm:$0xff]
  %v31 = vld [vmem:[%s1] sm:$0xf]
  %v32 = vld [vmem:[%s1 + $0x4] sm:$0xf]
  %v33 = vld [vmem:[%s1 + $0x8] sm:$0xf]
  %v34 = vld [vmem:[%s1 + $0xc] sm:$0xf]
  %v35 = vld [vmem:[%s1 + $0x10] sm:$0xf]
  %v36 = vld [vmem:[%s1 + $0x14] sm:$0xf]
  %v37 = vld [vmem:[%s1 + $0x18] sm:$0xf]
  %v38 = vld [vmem:[%s1 + $0x1c] sm:$0xf]
  %v39 = vld [vmem:[%s1 + $0x20] sm:$0xf]
  %v40 = vld [vmem:[%s1 + $0x24] sm:$0xf]
  %v41 = vld [vmem:[%s1 + $0x28] sm:$0xf]
  %v42 = vld [vmem:[%s1 + $0x2c] sm:$0xf]
  %v43 = vld [vmem:[%s1 + $0x30] sm:$0xf]
  %v44 = vld [vmem:[%s1 + $0x34] sm:$0xf]
  %v45 = vld [vmem:[%s1 + $0x38] sm:$0xf]
  %v46 = vld [vmem:[%s1 + $0x3c] sm:$0xf]
  %v47 = vld [vmem:[%s1 + $0x40] sm:$0xf]
  %v48 = vld [vmem:[%s1 + $0x44] sm:$0xf]
  %v49 = vld [vmem:[%s1 + $0x48] sm:$0xf]
  %v50 = vld [vmem:[%s1 + $0x4c] sm:$0xf]
  %v51 = vld [vmem:[%s1 + $0x50] sm:$0xf]
  %v52 = vld [vmem:[%s1 + $0x54] sm:$0xf]
  %v53 = vld [vmem:[%s1 + $0x58] sm:$0xf]
  %v54 = vld [vmem:[%s1 + $0x5c] sm:$0xf]
  %v55 = vld [vmem:[%s1 + $0x60] sm:$0xf]
  %v56 = vld [vmem:[%s1 + $0x64] sm:$0xf]
  %v57 = vld [vmem:[%s1 + $0x68] sm:$0xf]
  %v58 = vld [vmem:[%s1 + $0x6c] sm:$0xf]
  %v59 = vld [vmem:[%s1 + $0x70] sm:$0xf]
  %v60 = vld [vmem:[%s1 + $0x74] sm:$0xf]
  %v61 = vld [vmem:[%s1 + $0x78] sm:$0xf]
  %v62 = vld [vmem:[%s1 + $0x7c] sm:$0xf]
  %v79 = vunpack.c.l.b16 %v15
  %v80 = vunpack.c.h.b16 %v15
  %v81 = vunpack.c.l.b16 %v16
  %v82 = vunpack.c.h.b16 %v16
  %v83 = vunpack.c.l.b16 %v17
  %v84 = vunpack.c.h.b16 %v17
  %v85 = vunpack.c.l.b16 %v18
  %v86 = vunpack.c.h.b16 %v18
  %v87 = vunpack.c.l.b16 %v19
  %v88 = vunpack.c.h.b16 %v19
  %v89 = vunpack.c.l.b16 %v20
  %v90 = vunpack.c.h.b16 %v20
  %v91 = vunpack.c.l.b16 %v21
  %v92 = vunpack.c.h.b16 %v21
  %v93 = vunpack.c.l.b16 %v22
  %v94 = vunpack.c.h.b16 %v22
  %v95 = vunpack.c.l.b16 %v23
  %v96 = vunpack.c.h.b16 %v23
  %v97 = vunpack.c.l.b16 %v24
  %v98 = vunpack.c.h.b16 %v24
  %v99 = vunpack.c.l.b16 %v25
  %v100 = vunpack.c.h.b16 %v25
  %v101 = vunpack.c.l.b16 %v26
  %v102 = vunpack.c.h.b16 %v26
  %v103 = vunpack.c.l.b16 %v27
  %v104 = vunpack.c.h.b16 %v27
  %v105 = vunpack.c.l.b16 %v28
  %v106 = vunpack.c.h.b16 %v28
  %v107 = vunpack.c.l.b16 %v29
  %v108 = vunpack.c.h.b16 %v29
  %v109 = vunpack.c.l.b16 %v30
  %v110 = vunpack.c.h.b16 %v30
  %v111 = vpack.c.b16 %v81, %v79
  %v112 = vpack.c.b16 %v82, %v80
  %v113 = vpack.c.b16 %v85, %v83
  %v114 = vpack.c.b16 %v86, %v84
  %v115 = vpack.c.b16 %v89, %v87
  %v116 = vpack.c.b16 %v90, %v88
  %v117 = vpack.c.b16 %v93, %v91
  %v118 = vpack.c.b16 %v94, %v92
  %v119 = vpack.c.b16 %v97, %v95
  %v120 = vpack.c.b16 %v98, %v96
  %v121 = vpack.c.b16 %v101, %v99
  %v122 = vpack.c.b16 %v102, %v100
  %v123 = vpack.c.b16 %v105, %v103
  %v124 = vpack.c.b16 %v106, %v104
  %v125 = vpack.c.b16 %v109, %v107
  %v126 = vpack.c.b16 %v110, %v108
  %v175 = vunpack.c.l.b16 %v31
  %v176 = vunpack.c.l.b16 %v32
  %v177 = vunpack.c.l.b16 %v33
  %v178 = vunpack.c.l.b16 %v34
  %v179 = vunpack.c.l.b16 %v35
  %v180 = vunpack.c.l.b16 %v36
  %v181 = vunpack.c.l.b16 %v37
  %v182 = vunpack.c.l.b16 %v38
  %v183 = vunpack.c.l.b16 %v39
  %v184 = vunpack.c.l.b16 %v40
  %v185 = vunpack.c.l.b16 %v41
  %v186 = vunpack.c.l.b16 %v42
  %v187 = vunpack.c.l.b16 %v43
  %v188 = vunpack.c.l.b16 %v44
  %v189 = vunpack.c.l.b16 %v45
  %v190 = vunpack.c.l.b16 %v46
  %v191 = vunpack.c.l.b16 %v47
  %v192 = vunpack.c.l.b16 %v48
  %v193 = vunpack.c.l.b16 %v49
  %v194 = vunpack.c.l.b16 %v50
  %v195 = vunpack.c.l.b16 %v51
  %v196 = vunpack.c.l.b16 %v52
  %v197 = vunpack.c.l.b16 %v53
  %v198 = vunpack.c.l.b16 %v54
  %v199 = vunpack.c.l.b16 %v55
  %v200 = vunpack.c.l.b16 %v56
  %v201 = vunpack.c.l.b16 %v57
  %v202 = vunpack.c.l.b16 %v58
  %v203 = vunpack.c.l.b16 %v59
  %v204 = vunpack.c.l.b16 %v60
  %v205 = vunpack.c.l.b16 %v61
  %v206 = vunpack.c.l.b16 %v62
  %v207 = vpack.c.b16 %v176, %v175
  %v208 = vpack.c.b16 %v178, %v177
  %v209 = vpack.c.b16 %v180, %v179
  %v210 = vpack.c.b16 %v182, %v181
  %v211 = vpack.c.b16 %v184, %v183
  %v212 = vpack.c.b16 %v186, %v185
  %v213 = vpack.c.b16 %v188, %v187
  %v214 = vpack.c.b16 %v190, %v189
  %v215 = vpack.c.b16 %v192, %v191
  %v216 = vpack.c.b16 %v194, %v193
  %v217 = vpack.c.b16 %v196, %v195
  %v218 = vpack.c.b16 %v198, %v197
  %v219 = vpack.c.b16 %v200, %v199
  %v220 = vpack.c.b16 %v202, %v201
  %v221 = vpack.c.b16 %v204, %v203
  %v222 = vpack.c.b16 %v206, %v205
  %239 = vmatprep.subr.bf16.mxu0 0
  %240 = vmatpush1.bf16.msra.mxu0 %v207
  %241 = vmatprep.subr.bf16.mxu0 0
  %242 = vmatpush1.bf16.msra.mxu0 %v208
  %243 = vmatprep.subr.bf16.mxu0 0
  %244 = vmatpush1.bf16.msra.mxu0 %v209
  %245 = vmatprep.subr.bf16.mxu0 0
  %246 = vmatpush1.bf16.msra.mxu0 %v210
  %247 = vmatprep.subr.bf16.mxu0 0
  %248 = vmatpush1.bf16.msra.mxu0 %v211
  %249 = vmatprep.subr.bf16.mxu0 0
  %250 = vmatpush1.bf16.msra.mxu0 %v212
  %251 = vmatprep.subr.bf16.mxu0 0
  %252 = vmatpush1.bf16.msra.mxu0 %v213
  %253 = vmatprep.subr.bf16.mxu0 0
  %254 = vmatpush1.bf16.msra.mxu0 %v214
  %255 = vmatprep.subr.bf16.mxu0 0
  %256 = vmatpush1.bf16.msra.mxu0 %v215
  %257 = vmatprep.subr.bf16.mxu0 0
  %258 = vmatpush1.bf16.msra.mxu0 %v216
  %259 = vmatprep.subr.bf16.mxu0 0
  %260 = vmatpush1.bf16.msra.mxu0 %v217
  %261 = vmatprep.subr.bf16.mxu0 0
  %262 = vmatpush1.bf16.msra.mxu0 %v218
  %263 = vmatprep.subr.bf16.mxu0 0
  %264 = vmatpush1.bf16.msra.mxu0 %v219
  %265 = vmatprep.subr.bf16.mxu0 0
  %266 = vmatpush1.bf16.msra.mxu0 %v220
  %267 = vmatprep.subr.bf16.mxu0 0
  %268 = vmatpush1.bf16.msra.mxu0 %v221
  %269 = vmatprep.subr.bf16.mxu0 0
  %270 = vmatpush1.bf16.msra.mxu0 %v222
  %271 = vmatprep.mubr.bf16.mxu0 %v112
  %272 = vmatmul.mubr.bf16.gmra.mrb[0].mxu0 %v111
  %v273 = vpop.f32.mrb[0].mxu0
  %v274 = vadd.f32 0.0, %v273
  %v275 = vpop.f32.mrb[0].mxu0
  %v276 = vpop.f32.mrb[0].mxu0
  %v277 = vadd.f32 0.0, %v276
  %v278 = vpop.f32.mrb[0].mxu0
  %279 = vmatprep.mubr.bf16.mxu0 %v114
  %280 = vmatmul.mubr.bf16.gmra.mrb[0].mxu0 %v113
  %v281 = vpop.f32.mrb[0].mxu0
  %v282 = vadd.f32 0.0, %v281
  %v283 = vpop.f32.mrb[0].mxu0
  %v284 = vpop.f32.mrb[0].mxu0
  %v285 = vadd.f32 0.0, %v284
  %v286 = vpop.f32.mrb[0].mxu0
  %287 = vmatprep.mubr.bf16.mxu0 %v116
  %288 = vmatmul.mubr.bf16.gmra.mrb[0].mxu0 %v115
  %v289 = vpop.f32.mrb[0].mxu0
  %v290 = vadd.f32 0.0, %v289
  %v291 = vpop.f32.mrb[0].mxu0
  %v292 = vpop.f32.mrb[0].mxu0
  %v293 = vadd.f32 0.0, %v292
  %v294 = vpop.f32.mrb[0].mxu0
  %295 = vmatprep.mubr.bf16.mxu0 %v118
  %296 = vmatmul.mubr.bf16.gmra.mrb[0].mxu0 %v117
  %v297 = vpop.f32.mrb[0].mxu0
  %v298 = vadd.f32 0.0, %v297
  %v299 = vpop.f32.mrb[0].mxu0
  %v300 = vpop.f32.mrb[0].mxu0
  %v301 = vadd.f32 0.0, %v300
  %v302 = vpop.f32.mrb[0].mxu0
  %303 = vmatprep.mubr.bf16.mxu0 %v120
  %304 = vmatmul.mubr.bf16.gmra.mrb[0].mxu0 %v119
  %v305 = vpop.f32.mrb[0].mxu0
  %v306 = vadd.f32 0.0, %v305
  %v307 = vpop.f32.mrb[0].mxu0
  %v308 = vpop.f32.mrb[0].mxu0
  %v309 = vadd.f32 0.0, %v308
  %v310 = vpop.f32.mrb[0].mxu0
  %311 = vmatprep.mubr.bf16.mxu0 %v122
  %312 = vmatmul.mubr.bf16.gmra.mrb[0].mxu0 %v121
  %v313 = vpop.f32.mrb[0].mxu0
  %v314 = vadd.f32 0.0, %v313
  %v315 = vpop.f32.mrb[0].mxu0
  %v316 = vpop.f32.mrb[0].mxu0
  %v317 = vadd.f32 0.0, %v316
  %v318 = vpop.f32.mrb[0].mxu0
  %319 = vmatprep.mubr.bf16.mxu0 %v124
  %320 = vmatmul.mubr.bf16.gmra.mrb[0].mxu0 %v123
  %v321 = vpop.f32.mrb[0].mxu0
  %v322 = vadd.f32 0.0, %v321
  %v323 = vpop.f32.mrb[0].mxu0
  %v324 = vpop.f32.mrb[0].mxu0
  %v325 = vadd.f32 0.0, %v324
  %v326 = vpop.f32.mrb[0].mxu0
  %327 = vmatprep.mubr.bf16.mxu0 %v126
  %328 = vmatmul.mubr.bf16.gmra.mrb[0].mxu0 %v125
  %v329 = vpop.f32.mrb[0].mxu0
  %v330 = vadd.f32 0.0, %v329
  %v331 = vpop.f32.mrb[0].mxu0
  %v332 = vpop.f32.mrb[0].mxu0
  %v333 = vadd.f32 0.0, %v332
  %v334 = vpop.f32.mrb[0].mxu0
  %335 = vdwg.mxu0
  %336 = vst [vmem:[%s2] sm:$0xff] %v274
  %337 = vst [vmem:[%s2 + $0x8] sm:$0xff] %v277
  %338 = vst [vmem:[%s2 + $0x10] sm:$0xff] %v282
  %339 = vst [vmem:[%s2 + $0x18] sm:$0xff] %v285
  %340 = vst [vmem:[%s2 + $0x20] sm:$0xff] %v290
  %341 = vst [vmem:[%s2 + $0x28] sm:$0xff] %v293
  %342 = vst [vmem:[%s2 + $0x30] sm:$0xff] %v298
  %343 = vst [vmem:[%s2 + $0x38] sm:$0xff] %v301
  %344 = vst [vmem:[%s2 + $0x40] sm:$0xff] %v306
  %345 = vst [vmem:[%s2 + $0x48] sm:$0xff] %v309
  %346 = vst [vmem:[%s2 + $0x50] sm:$0xff] %v314
  %347 = vst [vmem:[%s2 + $0x58] sm:$0xff] %v317
  %348 = vst [vmem:[%s2 + $0x60] sm:$0xff] %v322
  %349 = vst [vmem:[%s2 + $0x68] sm:$0xff] %v325
  %350 = vst [vmem:[%s2 + $0x70] sm:$0xff] %v330
  %351 = vst [vmem:[%s2 + $0x78] sm:$0xff] %v333
  %v352 = vadd.f32 %v274, %v277
  %v353 = vadd.f32 %v352, %v282
  %v354 = vadd.f32 %v353, %v285
  %v355 = vadd.f32 %v354, %v290
  %v356 = vadd.f32 %v355, %v293
  %v357 = vadd.f32 %v356, %v298
  %v358 = vadd.f32 %v357, %v301
  %v359 = vadd.f32 %v358, %v306
  %v360 = vadd.f32 %v359, %v309
  %v361 = vadd.f32 %v360, %v314
  %v362 = vadd.f32 %v361, %v317
  %v363 = vadd.f32 %v362, %v322
  %v364 = vadd.f32 %v363, %v325
  %v365 = vadd.f32 %v364, %v330
  %v366 = vadd.f32 %v365, %v333
  %v367 = vrot.slane %v366, 4
  %v368 = vadd.f32 %v366, %v367
  %v369 = vrot.slane %v368, 2
  %v370 = vadd.f32 %v368, %v369
  %v371 = vrot.slane %v370, 1
  %v372 = vadd.f32 %v370, %v371
  %373 = vst [vmem:[%s3] sm:$0x1] %v372
  %v374 = vmul.f32 %v274, %v274
  %v375 = vmul.f32 %v277, %v277
  %v376 = vmul.f32 %v282, %v282
  %v377 = vmul.f32 %v285, %v285
  %v378 = vmul.f32 %v290, %v290
  %v379 = vmul.f32 %v293, %v293
  %v380 = vmul.f32 %v298, %v298
  %v381 = vmul.f32 %v301, %v301
  %v382 = vmul.f32 %v306, %v306
  %v383 = vmul.f32 %v309, %v309
  %v384 = vmul.f32 %v314, %v314
  %v385 = vmul.f32 %v317, %v317
  %v386 = vmul.f32 %v322, %v322
  %v387 = vmul.f32 %v325, %v325
  %v388 = vmul.f32 %v330, %v330
  %v389 = vmul.f32 %v333, %v333
  %v390 = vadd.f32 %v374, %v375
  %v391 = vadd.f32 %v390, %v376
  %v392 = vadd.f32 %v391, %v377
  %v393 = vadd.f32 %v392, %v378
  %v394 = vadd.f32 %v393, %v379
  %v395 = vadd.f32 %v394, %v380
  %v396 = vadd.f32 %v395, %v381
  %v397 = vadd.f32 %v396, %v382
  %v398 = vadd.f32 %v397, %v383
  %v399 = vadd.f32 %v398, %v384
  %v400 = vadd.f32 %v399, %v385
  %v401 = vadd.f32 %v400, %v386
  %v402 = vadd.f32 %v401, %v387
  %v403 = vadd.f32 %v402, %v388
  %v404 = vadd.f32 %v403, %v389
  %v405 = vrot.slane %v404, 4
  %v406 = vadd.f32 %v404, %v405
  %v407 = vrot.slane %v406, 2
  %v408 = vadd.f32 %v406, %v407
  %v409 = vrot.slane %v408, 1
  %v410 = vadd.f32 %v408, %v409
  %411 = vst [vmem:[%s4] sm:$0x1] %v410
  // Predicated region
  $region10: #{swiftlane_base_resblock.2} parent=0 // pred_check
    _
  $region11: #{swiftlane_base_resblock.2} parent=0 // pred_check_branch
    %413 = sbr.rel (0) target = $region13
  $region12: #{swiftlane_base_resblock.2} parent=0 // pred_region
    _
  $region13: #{swiftlane_base_resblock.2} parent=0 // pred_fallthru
    _
  // Predicated region
  $region14: #{swiftlane_base_resblock.2} parent=0 // pred_check
    _
  $region15: #{swiftlane_base_resblock.2} parent=0 // pred_check_branch
    %415 = sbr.rel (0) target = $region17
  $region16: #{swiftlane_base_resblock.2} parent=0 // pred_region
    _
  $region17: #{swiftlane_base_resblock.2} parent=0 // pred_fallthru
    _
  // Predicated region
  $region18: #{swiftlane_base_resblock.2} parent=0 // pred_check
    _
  $region19: #{swiftlane_base_resblock.2} parent=0 // pred_check_branch
    %417 = sbr.rel (0) target = $region21
  $region20: #{swiftlane_base_resblock.2} parent=0 // pred_region
    _
  $region21: #{swiftlane_base_resblock.2} parent=0 // pred_fallthru
    _
  // Predicated region
  $region22: #{swiftlane_base_resblock.2} parent=0 // pred_check
    _
  $region23: #{swiftlane_base_resblock.2} parent=0 // pred_check_branch
    %419 = sbr.rel (0) target = $region25
  $region24: #{swiftlane_base_resblock.2} parent=0 // pred_region
    _
  $region25: #{swiftlane_base_resblock.2} parent=0 // pred_fallthru
    _
  // Predicated region
  $region26: #{swiftlane_base_resblock.2} parent=0 // pred_check
    _
  $region27: #{swiftlane_base_resblock.2} parent=0 // pred_check_branch
    %421 = sbr.rel (0) target = $region29
  $region28: #{swiftlane_base_resblock.2} parent=0 // pred_region
    _
  $region29: #{swiftlane_base_resblock.2} parent=0 // pred_fallthru
    _
  // Predicated region
  $region30: #{swiftlane_base_resblock.2} parent=0 // pred_check
    _
  $region31: #{swiftlane_base_resblock.2} parent=0 // pred_check_branch
    %423 = sbr.rel (0) target = $region33
  $region32: #{swiftlane_base_resblock.2} parent=0 // pred_region
    _
  $region33: #{swiftlane_base_resblock.2} parent=0 // pred_fallthru
    _

</llo_original>
